<compile_context>
chip_gen: v6e
topology: v6e:2x2x1
jax: 0.10.0
libtpu: 0.0.40
codegen_flags: <defaults>
</compile_context>

<pallas_src>
import math

import jax
import jax.numpy as jnp
from jax.experimental import pallas as pl
from jax.experimental.pallas import tpu as pltpu


def _round_up(x, m):
    return ((x + m - 1) // m) * m


def _pick_tile(total, cap, min_tiles=1):
    """Largest multiple of 128 that divides `total`, is <= cap, and leaves at
    least `min_tiles` tiles (falls back to 128)."""
    best = 128
    t = 128
    while t <= min(cap, total):
        if total % t == 0 and total // t >= min_tiles:
            best = t
        t += 128
    return best


# ---------------------------------------------------------------------------
# Kernel bodies
# ---------------------------------------------------------------------------

def _linear_kernel(x_ref, w_ref, o_ref):
    # fts tile = x tile @ W  (bf16 operands, f32 accumulation on the MXU)
    o_ref[...] = jnp.dot(
        x_ref[...], w_ref[...], preferred_element_type=jnp.float32
    ).astype(o_ref.dtype)


def _make_agg_transform_kernel(tile_k, x_resident):
    """out = PReLU((adj @ x) @ W + bias); grid = (row tiles i, contraction k)."""

    def kernel(adj_ref, x_ref, w_ref, bias_ref, alpha_ref, out_ref, acc_ref):
        k = pl.program_id(1)

        @pl.when(k == 0)
        def _():
            acc_ref[...] = jnp.zeros_like(acc_ref)

        if x_resident:
            # Whole feature matrix is VMEM-resident; slice the k-th row chunk.
            x = x_ref[pl.ds(pl.multiple_of(k * tile_k, tile_k), tile_k), :]
        else:
            x = x_ref[...]

        # Dominant N^2 matmul: bf16 operands, f32 accumulation on the MXU.
        acc_ref[...] += jnp.dot(adj_ref[...], x,
                                preferred_element_type=jnp.float32)

        @pl.when(k == pl.num_programs(1) - 1)
        def _():
            # Epilogue once per output tile: small feature transform (bf16 MXU
            # operands) + bias + PReLU, all accumulated/applied in f32.
            h = jnp.dot(acc_ref[...].astype(w_ref.dtype), w_ref[...],
                        preferred_element_type=jnp.float32) + bias_ref[...]
            a = alpha_ref[...]                       # (1, 1) broadcast
            out_ref[...] = jnp.where(h > 0, h, a * h).astype(out_ref.dtype)

    return kernel


def _make_agg_kernel(tile_k, x_resident):
    """out = PReLU(adj @ fts + bias), accumulating straight into the f32 output."""

    def kernel(adj_ref, fts_ref, bias_ref, alpha_ref, out_ref):
        k = pl.program_id(1)

        @pl.when(k == 0)
        def _():
            out_ref[...] = jnp.zeros_like(out_ref)

        if x_resident:
            x = fts_ref[pl.ds(pl.multiple_of(k * tile_k, tile_k), tile_k), :]
        else:
            x = fts_ref[...]

        out_ref[...] += jnp.dot(adj_ref[...], x,
                                preferred_element_type=jnp.float32)

        @pl.when(k == pl.num_programs(1) - 1)
        def _():
            h = out_ref[...] + bias_ref[...]
            a = alpha_ref[...]
            out_ref[...] = jnp.where(h > 0, h, a * h)

    return kernel


# ---------------------------------------------------------------------------
# Wrappers
# ---------------------------------------------------------------------------

def _linear(x, w, *, tile_m, out_dtype):
    """Row-tiled fts = x @ w (bf16 MXU operands, f32 accumulation)."""
    n_p, f_in_p = x.shape
    f_out_p = w.shape[1]
    grid = (n_p // tile_m,)
    return pl.pallas_call(
        _linear_kernel,
        out_shape=jax.ShapeDtypeStruct((n_p, f_out_p), out_dtype),
        grid_spec=pltpu.PrefetchScalarGridSpec(
            num_scalar_prefetch=0,
            grid=grid,
            in_specs=[
                pl.BlockSpec((tile_m, f_in_p), lambda i: (i, 0)),
                pl.BlockSpec((f_in_p, f_out_p), lambda i: (0, 0)),
            ],
            out_specs=pl.BlockSpec((tile_m, f_out_p), lambda i: (i, 0)),
        ),
        compiler_params=pltpu.CompilerParams(
            dimension_semantics=("parallel",)),
        cost_estimate=pl.CostEstimate(
            flops=2 * n_p * f_in_p * f_out_p,
            transcendentals=0,
            bytes_accessed=(n_p * f_in_p + f_in_p * f_out_p + n_p * f_out_p)
            * jnp.dtype(out_dtype).itemsize,
        ),
    )(x, w)


def gcn_forward(seq, adj, weight, bias, alpha, *,
                compute_dtype=jnp.bfloat16, max_tile_m=256, max_tile_k=2048):
    """PReLU(adj @ (seq @ weight.T) + bias) — forward of the PyTorch GCN.

    seq:    [N, F_in]     node features
    adj:    [N, N]        dense adjacency (torch.spmm operand). Pass it already
                          cast to `compute_dtype` (with N a multiple of 128) to
                          skip the cast/pad pre-pass and amortize it across layers.
    weight: [F_out, F_in] nn.Linear weight (bias=False)
    bias:   [F_out]
    alpha:  scalar PReLU slope (single shared parameter)
    """
    n, f_in = seq.shape
    f_out, f_in_w = weight.shape
    assert f_in_w == f_in
    assert adj.shape == (n, n)

    n_p = _round_up(n, 128)
    f_in_p = _round_up(f_in, 128)
    f_out_p = _round_up(f_out, 128)

    # Row-tile of the output ("parallel" axis): keep >=2 tiles when possible so
    # both v7x TensorCores get work.  Contraction tile streams adj in big chunks.
    tile_m = _pick_tile(n_p, max_tile_m, min_tiles=2 if n_p >= 256 else 1)
    tile_k = _pick_tile(n_p, max_tile_k)
    grid = (n_p // tile_m, n_p // tile_k)

    comp_bytes = jnp.dtype(compute_dtype).itemsize

    # adj: only cast/pad if needed (caller can prepare it once and reuse).
    adj_p = adj if adj.dtype == compute_dtype else adj.astype(compute_dtype)
    if n_p != n:
        adj_p = jnp.pad(adj_p, ((0, n_p - n), (0, n_p - n)))

    seq_p = seq.astype(compute_dtype)
    if n_p != n or f_in_p != f_in:
        seq_p = jnp.pad(seq_p, ((0, n_p - n), (0, f_in_p - f_in)))

    w_p = weight.T.astype(compute_dtype)
    if f_in_p != f_in or f_out_p != f_out:
        w_p = jnp.pad(w_p, ((0, f_in_p - f_in), (0, f_out_p - f_out)))

    b_p = bias.astype(jnp.float32).reshape(1, f_out)
    if f_out_p != f_out:
        b_p = jnp.pad(b_p, ((0, 0), (0, f_out_p - f_out)))
    a_p = jnp.asarray(alpha, jnp.float32).reshape(1, 1)

    fused = f_in <= f_out            # (adj @ seq) @ W   vs   adj @ (seq @ W)
    f_x = f_in_p if fused else f_out_p

    # Keep the node-feature matrix VMEM-resident when both pipeline buffers fit
    # comfortably; otherwise stream it along the contraction axis.
    x_resident = 2 * n_p * f_x * comp_bytes <= (16 << 20)
    if x_resident:
        x_spec = pl.BlockSpec((n_p, f_x), lambda i, k: (0, 0))
        x_bytes = n_p * f_x * comp_bytes
    else:
        x_spec = pl.BlockSpec((tile_k, f_x), lambda i, k: (k, 0))
        x_bytes = grid[0] * n_p * f_x * comp_bytes

    adj_bytes = n_p * n_p * comp_bytes
    out_bytes = n_p * f_out_p * 4

    # Explicit VMEM budget: raise v5e's 16 MiB default, stay under v7x's 64 MiB.
    vmem_need = (
        2 * tile_m * tile_k * comp_bytes                              # adj (x2 buf)
        + 2 * (n_p if x_resident else tile_k) * f_x * comp_bytes      # features
        + 2 * tile_m * f_out_p * 4                                    # out (x2 buf)
        + 2 * f_in_p * f_out_p * comp_bytes                           # W
        + tile_m * f_in_p * 4                                         # acc scratch
        + (1 << 20)                                                   # bias/alpha/misc
    )
    vmem_limit = int(min(max(2 * vmem_need, 32 << 20), 48 << 20))
    compiler_params = pltpu.CompilerParams(
        dimension_semantics=("parallel", "arbitrary"),
        vmem_limit_bytes=vmem_limit,
    )

    if fused:
        # (adj @ seq) @ W : the N^2 matmul runs at the smaller feature width;
        # W / bias / PReLU are applied once per output tile in the finalize.
        out_p = pl.pallas_call(
            _make_agg_transform_kernel(tile_k, x_resident),
            out_shape=jax.ShapeDtypeStruct((n_p, f_out_p), jnp.float32),
            grid_spec=pltpu.PrefetchScalarGridSpec(
                num_scalar_prefetch=0,
                grid=grid,
                in_specs=[
                    pl.BlockSpec((tile_m, tile_k), lambda i, k: (i, k)),   # adj
                    x_spec,                                                # seq
                    pl.BlockSpec((f_in_p, f_out_p), lambda i, k: (0, 0)),  # W
                    pl.BlockSpec((1, f_out_p), lambda i, k: (0, 0)),       # bias
                    pl.BlockSpec((1, 1), lambda i, k: (0, 0)),             # alpha
                ],
                out_specs=pl.BlockSpec((tile_m, f_out_p), lambda i, k: (i, 0)),
                scratch_shapes=[pltpu.VMEM((tile_m, f_in_p), jnp.float32)],
            ),
            compiler_params=compiler_params,
            cost_estimate=pl.CostEstimate(
                flops=2 * n_p * n_p * f_in_p + 2 * n_p * f_in_p * f_out_p,
                transcendentals=0,
                bytes_accessed=adj_bytes + x_bytes + out_bytes,
            ),
        )(adj_p, seq_p, w_p, b_p, a_p)
    else:
        # F_out < F_in: transform first (shrinks width), then aggregate,
        # accumulating directly into the resident f32 output block.
        fts = _linear(seq_p, w_p, tile_m=tile_m, out_dtype=compute_dtype)
        out_p = pl.pallas_call(
            _make_agg_kernel(tile_k, x_resident),
            out_shape=jax.ShapeDtypeStruct((n_p, f_out_p), jnp.float32),
            grid_spec=pltpu.PrefetchScalarGridSpec(
                num_scalar_prefetch=0,
                grid=grid,
                in_specs=[
                    pl.BlockSpec((tile_m, tile_k), lambda i, k: (i, k)),   # adj
                    x_spec,                                                # fts
                    pl.BlockSpec((1, f_out_p), lambda i, k: (0, 0)),       # bias
                    pl.BlockSpec((1, 1), lambda i, k: (0, 0)),             # alpha
                ],
                out_specs=pl.BlockSpec((tile_m, f_out_p), lambda i, k: (i, 0)),
            ),
            compiler_params=compiler_params,
            cost_estimate=pl.CostEstimate(
                flops=2 * n_p * n_p * f_out_p,
                transcendentals=0,
                bytes_accessed=adj_bytes + x_bytes + out_bytes,
            ),
        )(adj_p, fts, b_p, a_p)

    return out_p[:n, :f_out]


def init_gcn_params(key, in_ft, out_ft):
    """Match GCN.__init__: xavier_normal_(gain=1.414) weight, zero bias, PReLU(0.25)."""
    std = 1.414 * math.sqrt(2.0 / (in_ft + out_ft))
    weight = jax.random.normal(key, (out_ft, in_ft), dtype=jnp.float32) * std
    bias = jnp.zeros((out_ft,), dtype=jnp.float32)
    alpha = jnp.float32(0.25)
    return weight, bias, alpha


if __name__ == "__main__":
    key = jax.random.PRNGKey(0)

    def run_case(n, in_ft, out_ft, case_key):
        kx, ka, kw = jax.random.split(case_key, 3)
        seq = jax.random.normal(kx, (n, in_ft), dtype=jnp.float32)
        adj = jax.random.uniform(ka, (n, n), dtype=jnp.float32)
        adj = adj / jnp.sum(adj, axis=1, keepdims=True)   # row-normalized dense adjacency
        weight, bias, alpha = init_gcn_params(kw, in_ft, out_ft)

        # Pre-cast adj to the compute dtype once (amortized across GCN layers in
        # a real encoder); the kernel then skips its cast/pad pre-pass entirely.
        adj_bf16 = adj.astype(jnp.bfloat16)

        out = gcn_forward(seq, adj_bf16, weight, bias, alpha)
        out = jax.block_until_ready(out)

        # pure-JAX f32 reference of the PyTorch forward
        h = adj @ (seq @ weight.T) + bias
        ref = jnp.where(h > 0, h, alpha * h)
        assert out.shape == (n, out_ft)
        max_err = float(jnp.max(jnp.abs(out - ref)))
        assert jnp.allclose(out, ref, atol=2e-2, rtol=5e-2), max_err
        return out

    k1, k2 = jax.random.split(key)
    run_case(384, 16, 128, k1)   # F_in <= F_out : fused (adj@seq)@W path
    run_case(256, 64, 32, k2)    # F_in >  F_out : seq@W kernel then adj@fts path

    print("KERNEL_OK")
</pallas_src>

<mosaic_0001>
module attributes {stable_mosaic.version = 11 : i64} {
  func.func @kernel(%arg0: i32, %arg1: i32, %arg2: memref<128x384xbf16, #tpu.memory_space<vmem>>, %arg3: memref<384x128xbf16, #tpu.memory_space<vmem>>, %arg4: memref<128x128xbf16, #tpu.memory_space<vmem>>, %arg5: memref<1x128xf32, #tpu.memory_space<vmem>>, %arg6: memref<1x1xf32, #tpu.memory_space<vmem>>, %arg7: memref<128x128xf32, #tpu.memory_space<vmem>>, %arg8: memref<128x128xf32, #tpu.memory_space<vmem>>) attributes {dimension_semantics = [#tpu.dimension_semantics<parallel>, #tpu.dimension_semantics<arbitrary>], iteration_bounds = array<i64: 3, 1>, scalar_prefetch = 0 : i64, scratch_operands = 1 : i64, tpu.core_type = #tpu.core_type<tc>, window_params = [{transform_indices = @transform_0, window_bounds = array<i64: 128, 384>}, {pipeline_mode = #tpu.pipeline_mode<synchronous>, transform_indices = @transform_1, window_bounds = array<i64: 384, 128>}, {pipeline_mode = #tpu.pipeline_mode<synchronous>, transform_indices = @transform_2, window_bounds = array<i64: 128, 128>}, {pipeline_mode = #tpu.pipeline_mode<synchronous>, transform_indices = @transform_3, window_bounds = array<i64: 1, 128>}, {pipeline_mode = #tpu.pipeline_mode<synchronous>, transform_indices = @transform_4, window_bounds = array<i64: 1, 1>}, {transform_indices = @transform_5, window_bounds = array<i64: 128, 128>}]} {
    %c0_i32 = arith.constant 0 : i32
    %0 = arith.cmpi eq, %arg1, %c0_i32 : i32
    %1 = arith.extui %0 : i1 to i32
    %c0_i32_0 = arith.constant 0 : i32
    %2 = arith.cmpi ne, %1, %c0_i32_0 : i32
    scf.if %2 {
      %cst_9 = arith.constant 0.000000e+00 : f32
      %15 = vector.broadcast %cst_9 : f32 to vector<128x128xf32>
      %c0_10 = arith.constant 0 : index
      %c0_11 = arith.constant 0 : index
      %16 = vector.load %arg8[%c0_10, %c0_11] : memref<128x128xf32, #tpu.memory_space<vmem>>, vector<128x128xf32>
      tpu.vector_store %arg8[%c0_10, %c0_11], %15 {strides = array<i32>} : memref<128x128xf32, #tpu.memory_space<vmem>>, vector<128x128xf32>,
    } else {
    }
    %c384_i32 = arith.constant 384 : i32
    %3 = arith.muli %arg1, %c384_i32 : i32
    %4 = tpu.assume_multiple %3, 384 : i32
    %5 = arith.index_cast %4 : i32 to index
    %c0 = arith.constant 0 : index
    %6 = vector.load %arg3[%5, %c0] : memref<384x128xbf16, #tpu.memory_space<vmem>>, vector<384x128xbf16>
    %c0_1 = arith.constant 0 : index
    %c0_2 = arith.constant 0 : index
    %7 = vector.load %arg8[%c0_1, %c0_2] : memref<128x128xf32, #tpu.memory_space<vmem>>, vector<128x128xf32>
    %c0_3 = arith.constant 0 : index
    %c0_4 = arith.constant 0 : index
    %8 = vector.load %arg2[%c0_3, %c0_4] : memref<128x384xbf16, #tpu.memory_space<vmem>>, vector<128x384xbf16>
    %cst = arith.constant dense<0.000000e+00> : vector<128x128xf32>
    %9 = tpu.matmul %8, %6, %cst {dimension_numbers = #tpu.dot_dimension_numbers<[1], [0], [0], [1], [0, 0, 1, 1], [], []>} : vector<128x384xbf16>, vector<384x128xbf16>, vector<128x128xf32> -> vector<128x128xf32>
    %10 = arith.addf %7, %9 : vector<128x128xf32>
    %c0_5 = arith.constant 0 : index
    %c0_6 = arith.constant 0 : index
    %11 = vector.load %arg8[%c0_5, %c0_6] : memref<128x128xf32, #tpu.memory_space<vmem>>, vector<128x128xf32>
    tpu.vector_store %arg8[%c0_5, %c0_6], %10 {strides = array<i32>} : memref<128x128xf32, #tpu.memory_space<vmem>>, vector<128x128xf32>,
    %c0_i32_7 = arith.constant 0 : i32
    %12 = arith.cmpi eq, %arg1, %c0_i32_7 : i32
    %13 = arith.extui %12 : i1 to i32
    %c0_i32_8 = arith.constant 0 : i32
    %14 = arith.cmpi ne, %13, %c0_i32_8 : i32
    scf.if %14 {
      %c0_9 = arith.constant 0 : index
      %c0_10 = arith.constant 0 : index
      %15 = vector.load %arg8[%c0_9, %c0_10] : memref<128x128xf32, #tpu.memory_space<vmem>>, vector<128x128xf32>
      %16 = arith.truncf %15 : vector<128x128xf32> to vector<128x128xbf16>
      %c0_11 = arith.constant 0 : index
      %c0_12 = arith.constant 0 : index
      %17 = vector.load %arg4[%c0_11, %c0_12] : memref<128x128xbf16, #tpu.memory_space<vmem>>, vector<128x128xbf16>
      %cst_13 = arith.constant dense<0.000000e+00> : vector<128x128xf32>
      %18 = tpu.matmul %16, %17, %cst_13 {dimension_numbers = #tpu.dot_dimension_numbers<[1], [0], [0], [1], [0, 0, 1, 1], [], []>} : vector<128x128xbf16>, vector<128x128xbf16>, vector<128x128xf32> -> vector<128x128xf32>
      %c0_14 = arith.constant 0 : index
      %c0_15 = arith.constant 0 : index
      %19 = vector.load %arg5[%c0_14, %c0_15] : memref<1x128xf32, #tpu.memory_space<vmem>>, vector<1x128xf32>
      %20 = vector.broadcast %19 : vector<1x128xf32> to vector<128x128xf32>
      %21 = arith.addf %18, %20 : vector<128x128xf32>
      %c0_16 = arith.constant 0 : index
      %c0_17 = arith.constant 0 : index
      %22 = vector.load %arg6[%c0_16, %c0_17] : memref<1x1xf32, #tpu.memory_space<vmem>>, vector<1x1xf32>
      %cst_18 = arith.constant 0.000000e+00 : f32
      %23 = vector.broadcast %cst_18 : f32 to vector<128x128xf32>
      %24 = arith.cmpf ogt, %21, %23 : vector<128x128xf32>
      %25 = vector.broadcast %22 : vector<1x1xf32> to vector<128x128xf32>
      %26 = arith.mulf %25, %21 : vector<128x128xf32>
      %27 = arith.select %24, %21, %26 : vector<128x128xi1>, vector<128x128xf32>
      %c0_19 = arith.constant 0 : index
      %c0_20 = arith.constant 0 : index
      %28 = vector.load %arg7[%c0_19, %c0_20] : memref<128x128xf32, #tpu.memory_space<vmem>>, vector<128x128xf32>
      tpu.vector_store %arg7[%c0_19, %c0_20], %27 {strides = array<i32>} : memref<128x128xf32, #tpu.memory_space<vmem>>, vector<128x128xf32>,
    } else {
    }
    return
  }
  func.func @transform_0(%arg0: i32, %arg1: i32) -> (i32, i32) {
    %c0_i32 = arith.constant 0 : i32
    return %arg0, %arg1 : i32, i32
  }
  func.func @transform_1(%arg0: i32, %arg1: i32) -> (i32, i32) {
    %c0_i32 = arith.constant 0 : i32
    %c0_i32_0 = arith.constant 0 : i32
    %c0_i32_1 = arith.constant 0 : i32
    return %c0_i32, %c0_i32_0 : i32, i32
  }
  func.func @transform_2(%arg0: i32, %arg1: i32) -> (i32, i32) {
    %c0_i32 = arith.constant 0 : i32
    %c0_i32_0 = arith.constant 0 : i32
    %c0_i32_1 = arith.constant 0 : i32
    return %c0_i32, %c0_i32_0 : i32, i32
  }
  func.func @transform_3(%arg0: i32, %arg1: i32) -> (i32, i32) {
    %c0_i32 = arith.constant 0 : i32
    %c0_i32_0 = arith.constant 0 : i32
    %c0_i32_1 = arith.constant 0 : i32
    return %c0_i32, %c0_i32_0 : i32, i32
  }
  func.func @transform_4(%arg0: i32, %arg1: i32) -> (i32, i32) {
    %c0_i32 = arith.constant 0 : i32
    %c0_i32_0 = arith.constant 0 : i32
    %c0_i32_1 = arith.constant 0 : i32
    return %c0_i32, %c0_i32_0 : i32, i32
  }
  func.func @transform_5(%arg0: i32, %arg1: i32) -> (i32, i32) {
    %c0_i32 = arith.constant 0 : i32
    %c0_i32_0 = arith.constant 0 : i32
    return %arg0, %c0_i32 : i32, i32
  }
}

</mosaic_0001>

<llo_original>
// kernel: tpu_custom_call.1
$region0: #{tpu_custom_call.1}
  #allocation0 [shape = 'u32[]', space=smem, size = 0x4, offset = 0x4, fixed_abs, tag = 'smem constant byte address 0x4 - core index']
  #allocation1 [shape = 'u32[144,128]{1,0:T(1,128)}', space=vmem, size = 0x12000, scoped, tag = 'internal scratch']
  #allocation2 [shape = 'f32[128,128]{1,0:T(8,128)}', space=vmem, size = 0x10000, scoped, tag = 'scratch operand']
  #allocation3 [shape = 'f32[1,1]{1,0:T(1,128)S(1)}', space=vmem, size = 0x200, scoped, tag = 'scoped memory for tpu_custom_call.1']
  %s0 = inlined_call_operand.hbm [shape: bf16[384,384], index: 0, kind: input, shape index: {}]
  %s1 = inlined_call_operand.hbm [shape: bf16[384,128], index: 1, kind: input, shape index: {}]
  %s2 = inlined_call_operand.hbm [shape: bf16[128,128], index: 2, kind: input, shape index: {}]
  %s3 = inlined_call_operand.vmem [shape: f32[1,128], index: 3, kind: input, shape index: {}]
  %s4 = inlined_call_operand.<no memory space> [shape: f32[1,1], index: 4, kind: input, shape index: {}]
  %s5 = inlined_call_operand.hbm [shape: f32[384,128], index: 5, kind: output, shape index: {}]
  %s6 = sld [smem:[#allocation0]]
  $region73: #{tpu_custom_call.1} parent=0
    _
  %s8 = ssub.s32 1, %s6
  %s9 = scalar_select 0, %s8, %s6
  %v10 = vstv %s4
  %11 = vst [vmem:[#allocation3] sm:$0x1] %v10
  $region1: #{tpu_custom_call.1} parent=0
    #allocation4 [shape = 'u8[196608]{0}', space=vmem, size = 0x30000, scoped, tag = 'input window, operand 0']
    #allocation5 [shape = 's32[2]{0}', space=sflag, size = 0x8, scoped, tag = 'scoped memory for tpu_custom_call.1']
    #allocation6 [shape = 's32[2]{0}', space=sflag, size = 0x8, scoped, tag = 'scoped memory for tpu_custom_call.1']
    #allocation7 [shape = 'u8[98304]{0}', space=vmem, size = 0x18000, scoped, tag = 'input window, operand 1, single buffered']
    #allocation8 [shape = 's32[1]{0}', space=sflag, size = 0x4, scoped, tag = 'scoped memory for tpu_custom_call.1']
    #allocation9 [shape = 'u8[32768]{0}', space=vmem, size = 0x8000, scoped, tag = 'input window, operand 2, single buffered']
    #allocation10 [shape = 'u8[131072]{0}', space=vmem, size = 0x20000, scoped, tag = 'output window, operand 0']
    %12 = vsyncpa [#allocation5], 0
    %s13 = scalar_lea.sflag [#allocation5], 1
    %14 = vsyncpa %s13, 0
    %15 = vsyncpa [#allocation8], 0
    %16 = vsyncpa [#allocation6], 0
    %s17 = scalar_lea.sflag [#allocation6], 1
    %18 = vsyncpa %s17, 0
    loop: start=0, step=1, limit=5
    $region2: #{tpu_custom_call.1} parent=1 // loop_pre_header
      _
    $region3: #{tpu_custom_call.1} parent=1 // loop_header
      %s20 = sphi 0, %s24
      %p21 = scmp.ge.s32.totalorder %s20, 5
      %s27 = sphi 0, %s39
      %s28 = sphi 0, %s35
      %s29 = sphi 0, %s27
      %s30 = sphi 0, %s28
      %s31 = sphi 0, %s29
      %s32 = sphi 0, %s30
      %s44 = sphi 0, %s46
      %s47 = sphi 0, %s44
      %s48 = sphi 0, %s47
      %s64 = sphi 0, %s48
      %s68 = sphi 0, %s68
      %s70 = sphi 0, %s68
      %s71 = sphi 0, %s70
      %s85 = sphi 0, %s71
      %s89 = sphi 0, %s89
      %s91 = sphi 0, %s89
      %s92 = sphi 0, %s91
      %s106 = sphi 0, %s92
      %s110 = sphi 0, %s110
      %s112 = sphi 0, %s110
      %s113 = sphi 0, %s112
      %s127 = sphi 0, %s113
      %s131 = sphi 0, %s131
      %s133 = sphi 0, %s131
      %s134 = sphi 0, %s133
      %s148 = sphi 0, %s134
      %s154 = sphi 0, %s156
      %s157 = sphi 0, %s154
      %s158 = sphi 0, %s157
      %s174 = sphi 0, %s158
    $region4: #{tpu_custom_call.1} parent=1 // loop_header_branch
      %23 = sbr.rel (%p21) target = $region8
    $region5: #{tpu_custom_call.1} parent=1 // loop_body
      %s25 = ssub.s32 %s20, 1
      %s26 = ssub.s32 %s20, 2
      %s33 = sadd.s32 1, %s28
      %p34 = scmp.ge.s32.totalorder %s33, 1
      %s35 = scalar_select %p34, 0, %s33
      %s36 = sadd.s32 1, %s27
      %s37 = scalar_select %p34, %s36, %s27
      %p38 = scmp.ge.s32.totalorder %s37, 3
      %s39 = scalar_select %p38, 0, %s37
      %s40 = ssub.s32 %s27, %s39
      %s41 = ssub.s32 %s28, %s35
      %s42 = sor.u32 %s40, %s41
      %p43 = scmp.eq.s32.totalorder %s42, 0
      %s45 = sadd.s32 %s44, 1
      %s46 = scalar_select %p43, %s44, %s45
      %p49 = pneg %p43
      %p50 = scmp.eq.s32.totalorder %s20, 2
      %p51 = por %p49, %p50
      %p52 = scmp.ne.s32.totalorder %s44, %s47
      %p53 = scmp.eq.s32.totalorder %s20, 0
      %p54 = por %p52, %p53
      %p55 = scmp.ne.s32.totalorder %s44, %s47
      %p56 = scmp.eq.s32.totalorder %s25, 2
      %p57 = por %p55, %p56
      %p58 = scmp.ne.s32.totalorder %s47, %s48
      %p59 = scmp.eq.s32.totalorder %s25, 0
      %p60 = por %p58, %p59
      %p61 = scmp.ne.s32.totalorder %s47, %s48
      %p62 = scmp.eq.s32.totalorder %s26, 2
      %p63 = por %p61, %p62
      %p65 = scmp.ne.s32.totalorder %s48, %s64
      %p66 = scmp.eq.s32.totalorder %s26, 0
      %p67 = por %p65, %p66
      %s69 = sadd.s32 %s68, 1
      %p72 = scmp.eq.s32.totalorder %s20, 2
      %p73 = scmp.ne.s32.totalorder %s68, %s70
      %p74 = scmp.eq.s32.totalorder %s20, 0
      %p75 = por %p73, %p74
      %p76 = scmp.ne.s32.totalorder %s68, %s70
      %p77 = scmp.eq.s32.totalorder %s25, 2
      %p78 = por %p76, %p77
      %p79 = scmp.ne.s32.totalorder %s70, %s71
      %p80 = scmp.eq.s32.totalorder %s25, 0
      %p81 = por %p79, %p80
      %p82 = scmp.ne.s32.totalorder %s70, %s71
      %p83 = scmp.eq.s32.totalorder %s26, 2
      %p84 = por %p82, %p83
      %p86 = scmp.ne.s32.totalorder %s71, %s85
      %p87 = scmp.eq.s32.totalorder %s26, 0
      %p88 = por %p86, %p87
      %s90 = sadd.s32 %s89, 1
      %p93 = scmp.eq.s32.totalorder %s20, 2
      %p94 = scmp.ne.s32.totalorder %s89, %s91
      %p95 = scmp.eq.s32.totalorder %s20, 0
      %p96 = por %p94, %p95
      %p97 = scmp.ne.s32.totalorder %s89, %s91
      %p98 = scmp.eq.s32.totalorder %s25, 2
      %p99 = por %p97, %p98
      %p100 = scmp.ne.s32.totalorder %s91, %s92
      %p101 = scmp.eq.s32.totalorder %s25, 0
      %p102 = por %p100, %p101
      %p103 = scmp.ne.s32.totalorder %s91, %s92
      %p104 = scmp.eq.s32.totalorder %s26, 2
      %p105 = por %p103, %p104
      %p107 = scmp.ne.s32.totalorder %s92, %s106
      %p108 = scmp.eq.s32.totalorder %s26, 0
      %p109 = por %p107, %p108
      %s111 = sadd.s32 %s110, 1
      %p114 = scmp.eq.s32.totalorder %s20, 2
      %p115 = scmp.ne.s32.totalorder %s110, %s112
      %p116 = scmp.eq.s32.totalorder %s20, 0
      %p117 = por %p115, %p116
      %p118 = scmp.ne.s32.totalorder %s110, %s112
      %p119 = scmp.eq.s32.totalorder %s25, 2
      %p120 = por %p118, %p119
      %p121 = scmp.ne.s32.totalorder %s112, %s113
      %p122 = scmp.eq.s32.totalorder %s25, 0
      %p123 = por %p121, %p122
      %p124 = scmp.ne.s32.totalorder %s112, %s113
      %p125 = scmp.eq.s32.totalorder %s26, 2
      %p126 = por %p124, %p125
      %p128 = scmp.ne.s32.totalorder %s113, %s127
      %p129 = scmp.eq.s32.totalorder %s26, 0
      %p130 = por %p128, %p129
      %s132 = sadd.s32 %s131, 1
      %p135 = scmp.eq.s32.totalorder %s20, 2
      %p136 = scmp.ne.s32.totalorder %s131, %s133
      %p137 = scmp.eq.s32.totalorder %s20, 0
      %p138 = por %p136, %p137
      %p139 = scmp.ne.s32.totalorder %s131, %s133
      %p140 = scmp.eq.s32.totalorder %s25, 2
      %p141 = por %p139, %p140
      %p142 = scmp.ne.s32.totalorder %s133, %s134
      %p143 = scmp.eq.s32.totalorder %s25, 0
      %p144 = por %p142, %p143
      %p145 = scmp.ne.s32.totalorder %s133, %s134
      %p146 = scmp.eq.s32.totalorder %s26, 2
      %p147 = por %p145, %p146
      %p149 = scmp.ne.s32.totalorder %s134, %s148
      %p150 = scmp.eq.s32.totalorder %s26, 0
      %p151 = por %p149, %p150
      %s152 = ssub.s32 %s27, %s39
      %p153 = scmp.eq.s32.totalorder %s152, 0
      %s155 = sadd.s32 %s154, 1
      %s156 = scalar_select %p153, %s154, %s155
      %p159 = pneg %p153
      %p160 = scmp.eq.s32.totalorder %s20, 2
      %p161 = por %p159, %p160
      %p162 = scmp.ne.s32.totalorder %s154, %s157
      %p163 = scmp.eq.s32.totalorder %s20, 0
      %p164 = por %p162, %p163
      %p165 = scmp.ne.s32.totalorder %s154, %s157
      %p166 = scmp.eq.s32.totalorder %s25, 2
      %p167 = por %p165, %p166
      %p168 = scmp.ne.s32.totalorder %s157, %s158
      %p169 = scmp.eq.s32.totalorder %s25, 0
      %p170 = por %p168, %p169
      %p171 = scmp.ne.s32.totalorder %s157, %s158
      %p172 = scmp.eq.s32.totalorder %s26, 2
      %p173 = por %p171, %p172
      %p175 = scmp.ne.s32.totalorder %s158, %s174
      %p176 = scmp.eq.s32.totalorder %s26, 0
      %p177 = por %p175, %p176
      %p178 = scmp.le.s32.totalorder 1, %s20
      %p179 = scmp.lt.s32.totalorder %s20, 4
      %p180 = pnand %p178, %p179
      %p181 = pneg %p180
      // Predicated region
      $region9: #{tpu_custom_call.1} parent=5 // pred_check
        _
      $region10: #{tpu_custom_call.1} parent=5 // pred_check_branch
        %183 = sbr.rel (%p180) target = $region12
      $region11: #{tpu_custom_call.1} parent=5 // pred_region
        %s184 = ssub.s32 %s20, 1
        // Predicated region
        $region13: #{tpu_custom_call.1} parent=11 // pred_check
          %p185 = pneg %p81
        $region14: #{tpu_custom_call.1} parent=11 // pred_check_branch
          %187 = sbr.rel (%p185) target = $region16
        $region15: #{tpu_custom_call.1} parent=11 // pred_region
          %s189 = ssub.s32 3072, 3072
          %190 = vsyncadd [#allocation8], %s189
          %s191 = sshll.u32 [#allocation7], 4
          %s192 = int_to_ptr.vmem [resolvable:$true] %s191
          %197 = dma.hbm_to_vmem [thread:$0]  %s1, 3072, %s192, [#allocation8], 64, 64, 4
        $region16: #{tpu_custom_call.1} parent=11 // pred_fallthru
          _
        // Predicated region
        $region17: #{tpu_custom_call.1} parent=11 // pred_check
          %p198 = pneg %p102
        $region18: #{tpu_custom_call.1} parent=11 // pred_check_branch
          %200 = sbr.rel (%p198) target = $region20
        $region19: #{tpu_custom_call.1} parent=11 // pred_region
          %s202 = ssub.s32 1024, 1024
          %203 = vsyncadd [#allocation8], %s202
          %s204 = sshll.u32 [#allocation9], 4
          %s205 = int_to_ptr.vmem [resolvable:$true] %s204
          %210 = dma.hbm_to_vmem [thread:$0]  %s2, 1024, %s205, [#allocation8], 64, 64, 4
        $region20: #{tpu_custom_call.1} parent=11 // pred_fallthru
          _
        // Predicated region
        $region21: #{tpu_custom_call.1} parent=11 // pred_check
          %p211 = pneg %p123
        $region22: #{tpu_custom_call.1} parent=11 // pred_check_branch
          %213 = sbr.rel (%p211) target = $region24
        $region23: #{tpu_custom_call.1} parent=11 // pred_region
          _
        $region24: #{tpu_custom_call.1} parent=11 // pred_fallthru
          _
        // Predicated region
        $region25: #{tpu_custom_call.1} parent=11 // pred_check
          %p214 = pneg %p144
        $region26: #{tpu_custom_call.1} parent=11 // pred_check_branch
          %216 = sbr.rel (%p214) target = $region28
        $region27: #{tpu_custom_call.1} parent=11 // pred_region
          _
        $region28: #{tpu_custom_call.1} parent=11 // pred_fallthru
          _
      $region12: #{tpu_custom_call.1} parent=5 // pred_fallthru
        _
      %p217 = scmp.lt.s32.totalorder %s20, 3
      // Predicated region
      $region29: #{tpu_custom_call.1} parent=5 // pred_check
        %p218 = pneg %p217
      $region30: #{tpu_custom_call.1} parent=5 // pred_check_branch
        %220 = sbr.rel (%p218) target = $region32
      $region31: #{tpu_custom_call.1} parent=5 // pred_region
        // Predicated region
        $region33: #{tpu_custom_call.1} parent=31 // pred_check
          %p221 = pneg %p54
        $region34: #{tpu_custom_call.1} parent=31 // pred_check_branch
          %223 = sbr.rel (%p221) target = $region36
        $region35: #{tpu_custom_call.1} parent=31 // pred_region
          %s224 = sand.u32 %s44, 1
          %s225 = scalar_lea.sflag [#allocation5], %s224
          %s226 = sand.u32 %s44, 1
          %s227 = smul.addr %s226, 192
          %s228 = scalar_lea.vmem [#allocation4], %s227
          %s229 = smul.u32 16, %s27
          %s230 = smul.u32 3, %s28
          %s232 = ssub.s32 3072, 3072
          %233 = vsyncadd %s225, %s232
          %s234 = smul.addr %s229, 3
          %s235 = sadd.s32 %s230, %s234
          %s236 = smul.addr %s235, 64
          %s237 = scalar_lea.hbm %s0, %s236
          %s238 = sshll.u32 %s228, 4
          %s239 = int_to_ptr.vmem [resolvable:$true] %s238
          %244 = dma.hbm_to_vmem [thread:$0]  %s237, 3072, %s239, %s225, 192, 192, 12
        $region36: #{tpu_custom_call.1} parent=31 // pred_fallthru
          _
      $region32: #{tpu_custom_call.1} parent=5 // pred_fallthru
        _
      %p245 = scmp.le.s32.totalorder 1, %s20
      %p246 = scmp.lt.s32.totalorder %s20, 4
      %p247 = pnand %p245, %p246
      %p248 = pneg %p247
      // Predicated region
      $region37: #{tpu_custom_call.1} parent=5 // pred_check
        _
      $region38: #{tpu_custom_call.1} parent=5 // pred_check_branch
        %250 = sbr.rel (%p247) target = $region40
      $region39: #{tpu_custom_call.1} parent=5 // pred_region
        %s251 = ssub.s32 %s20, 1
        %s252 = sand.u32 %s47, 1
        %s253 = scalar_lea.sflag [#allocation5], %s252
        %s254 = sand.u32 %s47, 1
        %s255 = smul.addr %s254, 192
        %s256 = scalar_lea.vmem [#allocation4], %s255
        // Predicated region
        $region41: #{tpu_custom_call.1} parent=39 // pred_check
          %p257 = pneg %p60
        $region42: #{tpu_custom_call.1} parent=39 // pred_check_branch
          %259 = sbr.rel (%p257) target = $region44
        $region43: #{tpu_custom_call.1} parent=39 // pred_region
          %260 = dma.done %s253, 3072
        $region44: #{tpu_custom_call.1} parent=39 // pred_fallthru
          _
        // Predicated region
        $region45: #{tpu_custom_call.1} parent=39 // pred_check
          %p261 = pneg %p81
        $region46: #{tpu_custom_call.1} parent=39 // pred_check_branch
          %263 = sbr.rel (%p261) target = $region48
        $region47: #{tpu_custom_call.1} parent=39 // pred_region
          %264 = dma.done [#allocation8], 3072
        $region48: #{tpu_custom_call.1} parent=39 // pred_fallthru
          _
        // Predicated region
        $region49: #{tpu_custom_call.1} parent=39 // pred_check
          %p265 = pneg %p102
        $region50: #{tpu_custom_call.1} parent=39 // pred_check_branch
          %267 = sbr.rel (%p265) target = $region52
        $region51: #{tpu_custom_call.1} parent=39 // pred_region
          %268 = dma.done [#allocation8], 1024
        $region52: #{tpu_custom_call.1} parent=39 // pred_fallthru
          _
        %s269 = sand.u32 %s47, 1
        %s270 = scalar_lea.sflag [#allocation5], %s269
        %s271 = sand.u32 %s47, 1
        %s272 = smul.addr %s271, 192
        %s273 = scalar_lea.vmem [#allocation4], %s272
        %p274 = pneg %p60
        %p275 = pneg %p57
        %p276 = pneg %p81
        %p277 = pneg %p78
        %p278 = pneg %p102
        %p279 = pneg %p99
        %p280 = pneg %p123
        %p281 = pneg %p120
        %p282 = pneg %p144
        %p283 = pneg %p141
        %p284 = pneg %p170
        %p285 = pneg %p167
        %s286 = sand.u32 %s157, 1
        %s287 = scalar_lea.sflag [#allocation6], %s286
        %s288 = sand.u32 %s157, 1
        %s289 = smul.addr %s288, 128
        %s290 = scalar_lea.vmem [#allocation10], %s289
        %s291 = smul.u32 16, %s29
        %s292 = smul.u32 3, %s30
        %s293 = smul.u32 16, %s29
        %p295 = scmp.eq.s32.totalorder %s30, 0
        // Predicated region
        $region53: #{tpu_custom_call.1} parent=39 // pred_check
          %p296 = pneg %p295
        $region54: #{tpu_custom_call.1} parent=39 // pred_check_branch
          %298 = sbr.rel (%p296) target = $region56
        $region55: #{tpu_custom_call.1} parent=39 // pred_region
          %299 = vst [vmem:[#allocation2] sm:$0xff] 0.0
          %300 = vst [vmem:[#allocation2 + $0x8] sm:$0xff] 0.0
          %301 = vst [vmem:[#allocation2 + $0x10] sm:$0xff] 0.0
          %302 = vst [vmem:[#allocation2 + $0x18] sm:$0xff] 0.0
          %303 = vst [vmem:[#allocation2 + $0x20] sm:$0xff] 0.0
          %304 = vst [vmem:[#allocation2 + $0x28] sm:$0xff] 0.0
          %305 = vst [vmem:[#allocation2 + $0x30] sm:$0xff] 0.0
          %306 = vst [vmem:[#allocation2 + $0x38] sm:$0xff] 0.0
          %307 = vst [vmem:[#allocation2 + $0x40] sm:$0xff] 0.0
          %308 = vst [vmem:[#allocation2 + $0x48] sm:$0xff] 0.0
          %309 = vst [vmem:[#allocation2 + $0x50] sm:$0xff] 0.0
          %310 = vst [vmem:[#allocation2 + $0x58] sm:$0xff] 0.0
          %311 = vst [vmem:[#allocation2 + $0x60] sm:$0xff] 0.0
          %312 = vst [vmem:[#allocation2 + $0x68] sm:$0xff] 0.0
          %313 = vst [vmem:[#allocation2 + $0x70] sm:$0xff] 0.0
          %314 = vst [vmem:[#allocation2 + $0x78] sm:$0xff] 0.0
        $region56: #{tpu_custom_call.1} parent=39 // pred_fallthru
          _
        %s315 = smul.u32 %s30, 384
        %s316 = sshra.s32 %s315, 3
        %s317 = sand.u32 %s315, 7
        %s318 = smul.addr %s316, 4
        %s319 = scalar_lea.vmem [#allocation7], %s318
        %v320 = vld [vmem:[%s319] sm:$0xf]
        %v321 = vld [vmem:[%s319 + $0x4] sm:$0xf]
        %v322 = vld [vmem:[%s319 + $0x8] sm:$0xf]
        %v323 = vld [vmem:[%s319 + $0xc] sm:$0xf]
        %v324 = vld [vmem:[%s319 + $0x10] sm:$0xf]
        %v325 = vld [vmem:[%s319 + $0x14] sm:$0xf]
        %v326 = vld [vmem:[%s319 + $0x18] sm:$0xf]
        %v327 = vld [vmem:[%s319 + $0x1c] sm:$0xf]
        %v328 = vld [vmem:[%s319 + $0x20] sm:$0xf]
        %v329 = vld [vmem:[%s319 + $0x24] sm:$0xf]
        %v330 = vld [vmem:[%s319 + $0x28] sm:$0xf]
        %v331 = vld [vmem:[%s319 + $0x2c] sm:$0xf]
        %v332 = vld [vmem:[%s319 + $0x30] sm:$0xf]
        %v333 = vld [vmem:[%s319 + $0x34] sm:$0xf]
        %v334 = vld [vmem:[%s319 + $0x38] sm:$0xf]
        %v335 = vld [vmem:[%s319 + $0x3c] sm:$0xf]
        %v336 = vld [vmem:[%s319 + $0x40] sm:$0xf]
        %v337 = vld [vmem:[%s319 + $0x44] sm:$0xf]
        %v338 = vld [vmem:[%s319 + $0x48] sm:$0xf]
        %v339 = vld [vmem:[%s319 + $0x4c] sm:$0xf]
        %v340 = vld [vmem:[%s319 + $0x50] sm:$0xf]
        %v341 = vld [vmem:[%s319 + $0x54] sm:$0xf]
        %v342 = vld [vmem:[%s319 + $0x58] sm:$0xf]
        %v343 = vld [vmem:[%s319 + $0x5c] sm:$0xf]
        %v344 = vld [vmem:[%s319 + $0x60] sm:$0xf]
        %v345 = vld [vmem:[%s319 + $0x64] sm:$0xf]
        %v346 = vld [vmem:[%s319 + $0x68] sm:$0xf]
        %v347 = vld [vmem:[%s319 + $0x6c] sm:$0xf]
        %v348 = vld [vmem:[%s319 + $0x70] sm:$0xf]
        %v349 = vld [vmem:[%s319 + $0x74] sm:$0xf]
        %v350 = vld [vmem:[%s319 + $0x78] sm:$0xf]
        %v351 = vld [vmem:[%s319 + $0x7c] sm:$0xf]
        %v352 = vld [vmem:[%s319 + $0x80] sm:$0xf]
        %v353 = vld [vmem:[%s319 + $0x84] sm:$0xf]
        %v354 = vld [vmem:[%s319 + $0x88] sm:$0xf]
        %v355 = vld [vmem:[%s319 + $0x8c] sm:$0xf]
        %v356 = vld [vmem:[%s319 + $0x90] sm:$0xf]
        %v357 = vld [vmem:[%s319 + $0x94] sm:$0xf]
        %v358 = vld [vmem:[%s319 + $0x98] sm:$0xf]
        %v359 = vld [vmem:[%s319 + $0x9c] sm:$0xf]
        %v360 = vld [vmem:[%s319 + $0xa0] sm:$0xf]
        %v361 = vld [vmem:[%s319 + $0xa4] sm:$0xf]
        %v362 = vld [vmem:[%s319 + $0xa8] sm:$0xf]
        %v363 = vld [vmem:[%s319 + $0xac] sm:$0xf]
        %v364 = vld [vmem:[%s319 + $0xb0] sm:$0xf]
        %v365 = vld [vmem:[%s319 + $0xb4] sm:$0xf]
        %v366 = vld [vmem:[%s319 + $0xb8] sm:$0xf]
        %v367 = vld [vmem:[%s319 + $0xbc] sm:$0xf]
        %v368 = vld [vmem:[#allocation2] sm:$0xff]
        %v369 = vld [vmem:[#allocation2 + $0x8] sm:$0xff]
        %v370 = vld [vmem:[#allocation2 + $0x10] sm:$0xff]
        %v371 = vld [vmem:[#allocation2 + $0x18] sm:$0xff]
        %v372 = vld [vmem:[#allocation2 + $0x20] sm:$0xff]
        %v373 = vld [vmem:[#allocation2 + $0x28] sm:$0xff]
        %v374 = vld [vmem:[#allocation2 + $0x30] sm:$0xff]
        %v375 = vld [vmem:[#allocation2 + $0x38] sm:$0xff]
        %v376 = vld [vmem:[#allocation2 + $0x40] sm:$0xff]
        %v377 = vld [vmem:[#allocation2 + $0x48] sm:$0xff]
        %v378 = vld [vmem:[#allocation2 + $0x50] sm:$0xff]
        %v379 = vld [vmem:[#allocation2 + $0x58] sm:$0xff]
        %v380 = vld [vmem:[#allocation2 + $0x60] sm:$0xff]
        %v381 = vld [vmem:[#allocation2 + $0x68] sm:$0xff]
        %v382 = vld [vmem:[#allocation2 + $0x70] sm:$0xff]
        %v383 = vld [vmem:[#allocation2 + $0x78] sm:$0xff]
        %v384 = vld [vmem:[%s256] sm:$0xff]
        %v385 = vld [vmem:[%s256 + $0x8] sm:$0xf]
        %v386 = vld [vmem:[%s256 + $0xc] sm:$0xff]
        %v387 = vld [vmem:[%s256 + $0x14] sm:$0xf]
        %v388 = vld [vmem:[%s256 + $0x18] sm:$0xff]
        %v389 = vld [vmem:[%s256 + $0x20] sm:$0xf]
        %v390 = vld [vmem:[%s256 + $0x24] sm:$0xff]
        %v391 = vld [vmem:[%s256 + $0x2c] sm:$0xf]
        %v392 = vld [vmem:[%s256 + $0x30] sm:$0xff]
        %v393 = vld [vmem:[%s256 + $0x38] sm:$0xf]
        %v394 = vld [vmem:[%s256 + $0x3c] sm:$0xff]
        %v395 = vld [vmem:[%s256 + $0x44] sm:$0xf]
        %v396 = vld [vmem:[%s256 + $0x48] sm:$0xff]
        %v397 = vld [vmem:[%s256 + $0x50] sm:$0xf]
        %v398 = vld [vmem:[%s256 + $0x54] sm:$0xff]
        %v399 = vld [vmem:[%s256 + $0x5c] sm:$0xf]
        %v400 = vld [vmem:[%s256 + $0x60] sm:$0xff]
        %v401 = vld [vmem:[%s256 + $0x68] sm:$0xf]
        %v402 = vld [vmem:[%s256 + $0x6c] sm:$0xff]
        %v403 = vld [vmem:[%s256 + $0x74] sm:$0xf]
        %v404 = vld [vmem:[%s256 + $0x78] sm:$0xff]
        %v405 = vld [vmem:[%s256 + $0x80] sm:$0xf]
        %v406 = vld [vmem:[%s256 + $0x84] sm:$0xff]
        %v407 = vld [vmem:[%s256 + $0x8c] sm:$0xf]
        %v408 = vld [vmem:[%s256 + $0x90] sm:$0xff]
        %v409 = vld [vmem:[%s256 + $0x98] sm:$0xf]
        %v410 = vld [vmem:[%s256 + $0x9c] sm:$0xff]
        %v411 = vld [vmem:[%s256 + $0xa4] sm:$0xf]
        %v412 = vld [vmem:[%s256 + $0xa8] sm:$0xff]
        %v413 = vld [vmem:[%s256 + $0xb0] sm:$0xf]
        %v414 = vld [vmem:[%s256 + $0xb4] sm:$0xff]
        %v415 = vld [vmem:[%s256 + $0xbc] sm:$0xf]
        %v448 = vunpack.c.l.b16 %v384
        %v449 = vunpack.c.h.b16 %v384
        %v450 = vunpack.c.l.b16 %v385
        %v451 = vunpack.c.l.b16 %v386
        %v452 = vunpack.c.h.b16 %v386
        %v453 = vunpack.c.l.b16 %v387
        %v454 = vunpack.c.l.b16 %v388
        %v455 = vunpack.c.h.b16 %v388
        %v456 = vunpack.c.l.b16 %v389
        %v457 = vunpack.c.l.b16 %v390
        %v458 = vunpack.c.h.b16 %v390
        %v459 = vunpack.c.l.b16 %v391
        %v460 = vunpack.c.l.b16 %v392
        %v461 = vunpack.c.h.b16 %v392
        %v462 = vunpack.c.l.b16 %v393
        %v463 = vunpack.c.l.b16 %v394
        %v464 = vunpack.c.h.b16 %v394
        %v465 = vunpack.c.l.b16 %v395
        %v466 = vunpack.c.l.b16 %v396
        %v467 = vunpack.c.h.b16 %v396
        %v468 = vunpack.c.l.b16 %v397
        %v469 = vunpack.c.l.b16 %v398
        %v470 = vunpack.c.h.b16 %v398
        %v471 = vunpack.c.l.b16 %v399
        %v472 = vunpack.c.l.b16 %v400
        %v473 = vunpack.c.h.b16 %v400
        %v474 = vunpack.c.l.b16 %v401
        %v475 = vunpack.c.l.b16 %v402
        %v476 = vunpack.c.h.b16 %v402
        %v477 = vunpack.c.l.b16 %v403
        %v478 = vunpack.c.l.b16 %v404
        %v479 = vunpack.c.h.b16 %v404
        %v480 = vunpack.c.l.b16 %v405
        %v481 = vunpack.c.l.b16 %v406
        %v482 = vunpack.c.h.b16 %v406
        %v483 = vunpack.c.l.b16 %v407
        %v484 = vunpack.c.l.b16 %v408
        %v485 = vunpack.c.h.b16 %v408
        %v486 = vunpack.c.l.b16 %v409
        %v487 = vunpack.c.l.b16 %v410
        %v488 = vunpack.c.h.b16 %v410
        %v489 = vunpack.c.l.b16 %v411
        %v490 = vunpack.c.l.b16 %v412
        %v491 = vunpack.c.h.b16 %v412
        %v492 = vunpack.c.l.b16 %v413
        %v493 = vunpack.c.l.b16 %v414
        %v494 = vunpack.c.h.b16 %v414
        %v495 = vunpack.c.l.b16 %v415
        %v496 = vpack.c.b16 %v451, %v448
        %v497 = vpack.c.b16 %v452, %v449
        %v498 = vpack.c.b16 %v453, %v450
        %v499 = vpack.c.b16 %v457, %v454
        %v500 = vpack.c.b16 %v458, %v455
        %v501 = vpack.c.b16 %v459, %v456
        %v502 = vpack.c.b16 %v463, %v460
        %v503 = vpack.c.b16 %v464, %v461
        %v504 = vpack.c.b16 %v465, %v462
        %v505 = vpack.c.b16 %v469, %v466
        %v506 = vpack.c.b16 %v470, %v467
        %v507 = vpack.c.b16 %v471, %v468
        %v508 = vpack.c.b16 %v475, %v472
        %v509 = vpack.c.b16 %v476, %v473
        %v510 = vpack.c.b16 %v477, %v474
        %v511 = vpack.c.b16 %v481, %v478
        %v512 = vpack.c.b16 %v482, %v479
        %v513 = vpack.c.b16 %v483, %v480
        %v514 = vpack.c.b16 %v487, %v484
        %v515 = vpack.c.b16 %v488, %v485
        %v516 = vpack.c.b16 %v489, %v486
        %v517 = vpack.c.b16 %v493, %v490
        %v518 = vpack.c.b16 %v494, %v491
        %v519 = vpack.c.b16 %v495, %v492
        %v592 = vunpack.c.l.b16 %v320
        %v593 = vunpack.c.l.b16 %v321
        %v594 = vunpack.c.l.b16 %v322
        %v595 = vunpack.c.l.b16 %v323
        %v596 = vunpack.c.l.b16 %v324
        %v597 = vunpack.c.l.b16 %v325
        %v598 = vunpack.c.l.b16 %v326
        %v599 = vunpack.c.l.b16 %v327
        %v600 = vunpack.c.l.b16 %v328
        %v601 = vunpack.c.l.b16 %v329
        %v602 = vunpack.c.l.b16 %v330
        %v603 = vunpack.c.l.b16 %v331
        %v604 = vunpack.c.l.b16 %v332
        %v605 = vunpack.c.l.b16 %v333
        %v606 = vunpack.c.l.b16 %v334
        %v607 = vunpack.c.l.b16 %v335
        %v608 = vunpack.c.l.b16 %v336
        %v609 = vunpack.c.l.b16 %v337
        %v610 = vunpack.c.l.b16 %v338
        %v611 = vunpack.c.l.b16 %v339
        %v612 = vunpack.c.l.b16 %v340
        %v613 = vunpack.c.l.b16 %v341
        %v614 = vunpack.c.l.b16 %v342
        %v615 = vunpack.c.l.b16 %v343
        %v616 = vunpack.c.l.b16 %v344
        %v617 = vunpack.c.l.b16 %v345
        %v618 = vunpack.c.l.b16 %v346
        %v619 = vunpack.c.l.b16 %v347
        %v620 = vunpack.c.l.b16 %v348
        %v621 = vunpack.c.l.b16 %v349
        %v622 = vunpack.c.l.b16 %v350
        %v623 = vunpack.c.l.b16 %v351
        %v624 = vunpack.c.l.b16 %v352
        %v625 = vunpack.c.l.b16 %v353
        %v626 = vunpack.c.l.b16 %v354
        %v627 = vunpack.c.l.b16 %v355
        %v628 = vunpack.c.l.b16 %v356
        %v629 = vunpack.c.l.b16 %v357
        %v630 = vunpack.c.l.b16 %v358
        %v631 = vunpack.c.l.b16 %v359
        %v632 = vunpack.c.l.b16 %v360
        %v633 = vunpack.c.l.b16 %v361
        %v634 = vunpack.c.l.b16 %v362
        %v635 = vunpack.c.l.b16 %v363
        %v636 = vunpack.c.l.b16 %v364
        %v637 = vunpack.c.l.b16 %v365
        %v638 = vunpack.c.l.b16 %v366
        %v639 = vunpack.c.l.b16 %v367
        %v640 = vpack.c.b16 %v593, %v592
        %v641 = vpack.c.b16 %v595, %v594
        %v642 = vpack.c.b16 %v597, %v596
        %v643 = vpack.c.b16 %v599, %v598
        %v644 = vpack.c.b16 %v601, %v600
        %v645 = vpack.c.b16 %v603, %v602
        %v646 = vpack.c.b16 %v605, %v604
        %v647 = vpack.c.b16 %v607, %v606
        %v648 = vpack.c.b16 %v609, %v608
        %v649 = vpack.c.b16 %v611, %v610
        %v650 = vpack.c.b16 %v613, %v612
        %v651 = vpack.c.b16 %v615, %v614
        %v652 = vpack.c.b16 %v617, %v616
        %v653 = vpack.c.b16 %v619, %v618
        %v654 = vpack.c.b16 %v621, %v620
        %v655 = vpack.c.b16 %v623, %v622
        %v656 = vpack.c.b16 %v625, %v624
        %v657 = vpack.c.b16 %v627, %v626
        %v658 = vpack.c.b16 %v629, %v628
        %v659 = vpack.c.b16 %v631, %v630
        %v660 = vpack.c.b16 %v633, %v632
        %v661 = vpack.c.b16 %v635, %v634
        %v662 = vpack.c.b16 %v637, %v636
        %v663 = vpack.c.b16 %v639, %v638
        %688 = vmatprep.subr.bf16.mxu0 0
        %689 = vmatpush1.bf16.msra.mxu0 %v647
        %690 = vmatprep.subr.bf16.mxu0 0
        %691 = vmatpush1.bf16.msra.mxu0 %v646
        %692 = vmatprep.subr.bf16.mxu0 0
        %693 = vmatpush1.bf16.msra.mxu0 %v645
        %694 = vmatprep.subr.bf16.mxu0 0
        %695 = vmatpush1.bf16.msra.mxu0 %v644
        %696 = vmatprep.subr.bf16.mxu0 0
        %697 = vmatpush1.bf16.msra.mxu0 %v643
        %698 = vmatprep.subr.bf16.mxu0 0
        %699 = vmatpush1.bf16.msra.mxu0 %v642
        %700 = vmatprep.subr.bf16.mxu0 0
        %701 = vmatpush1.bf16.msra.mxu0 %v641
        %702 = vmatprep.subr.bf16.mxu0 0
        %703 = vmatpush1.bf16.msra.mxu0 %v640
        %704 = vmatprep.subr.bf16.mxu0 0
        %705 = vmatpush2.bf16.msra.mxu0 %v655
        %706 = vmatprep.subr.bf16.mxu0 0
        %707 = vmatpush2.bf16.msra.mxu0 %v654
        %708 = vmatprep.subr.bf16.mxu0 0
        %709 = vmatpush2.bf16.msra.mxu0 %v653
        %710 = vmatprep.subr.bf16.mxu0 0
        %711 = vmatpush2.bf16.msra.mxu0 %v652
        %712 = vmatprep.subr.bf16.mxu0 0
        %713 = vmatpush2.bf16.msra.mxu0 %v651
        %714 = vmatprep.subr.bf16.mxu0 0
        %715 = vmatpush2.bf16.msra.mxu0 %v650
        %716 = vmatprep.subr.bf16.mxu0 0
        %717 = vmatpush2.bf16.msra.mxu0 %v649
        %718 = vmatprep.subr.bf16.mxu0 0
        %719 = vmatpush2.bf16.msra.mxu0 %v648
        %720 = vmatprep.mubr.bf16.mxu0 %v497
        %721 = vmatmul.mubr.bf16.gmra.mxu0 %v496
        %v722 = vpop.f32.mrf.mxu0
        %v723 = vadd.f32 0.0, %v722
        %v724 = vpop.f32.mrf.mxu0
        %v725 = vpop.f32.mrf.mxu0
        %v726 = vadd.f32 0.0, %v725
        %v727 = vpop.f32.mrf.mxu0
        %728 = vmatprep.mubr.bf16.mxu0 %v500
        %729 = vmatmul.mubr.bf16.gmra.mxu0 %v499
        %v730 = vpop.f32.mrf.mxu0
        %v731 = vadd.f32 0.0, %v730
        %v732 = vpop.f32.mrf.mxu0
        %v733 = vpop.f32.mrf.mxu0
        %v734 = vadd.f32 0.0, %v733
        %v735 = vpop.f32.mrf.mxu0
        %736 = vmatprep.mubr.bf16.mxu0 %v503
        %737 = vmatmul.mubr.bf16.gmra.mxu0 %v502
        %v738 = vpop.f32.mrf.mxu0
        %v739 = vadd.f32 0.0, %v738
        %v740 = vpop.f32.mrf.mxu0
        %v741 = vpop.f32.mrf.mxu0
        %v742 = vadd.f32 0.0, %v741
        %v743 = vpop.f32.mrf.mxu0
        %744 = vmatprep.mubr.bf16.mxu0 %v506
        %745 = vmatmul.mubr.bf16.gmra.mxu0 %v505
        %v746 = vpop.f32.mrf.mxu0
        %v747 = vadd.f32 0.0, %v746
        %v748 = vpop.f32.mrf.mxu0
        %v749 = vpop.f32.mrf.mxu0
        %v750 = vadd.f32 0.0, %v749
        %v751 = vpop.f32.mrf.mxu0
        %752 = vmatprep.mubr.bf16.mxu0 %v509
        %753 = vmatmul.mubr.bf16.gmra.mxu0 %v508
        %v754 = vpop.f32.mrf.mxu0
        %v755 = vadd.f32 0.0, %v754
        %v756 = vpop.f32.mrf.mxu0
        %v757 = vpop.f32.mrf.mxu0
        %v758 = vadd.f32 0.0, %v757
        %v759 = vpop.f32.mrf.mxu0
        %760 = vmatprep.mubr.bf16.mxu0 %v512
        %761 = vmatmul.mubr.bf16.gmra.mxu0 %v511
        %v762 = vpop.f32.mrf.mxu0
        %v763 = vadd.f32 0.0, %v762
        %v764 = vpop.f32.mrf.mxu0
        %v765 = vpop.f32.mrf.mxu0
        %v766 = vadd.f32 0.0, %v765
        %v767 = vpop.f32.mrf.mxu0
        %768 = vmatprep.mubr.bf16.mxu0 %v515
        %769 = vmatmul.mubr.bf16.gmra.mxu0 %v514
        %v770 = vpop.f32.mrf.mxu0
        %v771 = vadd.f32 0.0, %v770
        %v772 = vpop.f32.mrf.mxu0
        %v773 = vpop.f32.mrf.mxu0
        %v774 = vadd.f32 0.0, %v773
        %v775 = vpop.f32.mrf.mxu0
        %776 = vmatprep.mubr.bf16.mxu0 %v518
        %777 = vmatmul.mubr.bf16.gmra.mxu0 %v517
        %v778 = vpop.f32.mrf.mxu0
        %v779 = vadd.f32 0.0, %v778
        %v780 = vpop.f32.mrf.mxu0
        %v781 = vpop.f32.mrf.mxu0
        %v782 = vadd.f32 0.0, %v781
        %v783 = vpop.f32.mrf.mxu0
        %784 = vdwg.mxu0
        %785 = vmatprep.subr.bf16.mxu0 0
        %786 = vmatpush1.bf16.msra.mxu0 %v663
        %787 = vmatprep.subr.bf16.mxu0 0
        %788 = vmatpush1.bf16.msra.mxu0 %v662
        %789 = vmatprep.subr.bf16.mxu0 0
        %790 = vmatpush1.bf16.msra.mxu0 %v661
        %791 = vmatprep.subr.bf16.mxu0 0
        %792 = vmatpush1.bf16.msra.mxu0 %v660
        %793 = vmatprep.subr.bf16.mxu0 0
        %794 = vmatpush1.bf16.msra.mxu0 %v659
        %795 = vmatprep.subr.bf16.mxu0 0
        %796 = vmatpush1.bf16.msra.mxu0 %v658
        %797 = vmatprep.subr.bf16.mxu0 0
        %798 = vmatpush1.bf16.msra.mxu0 %v657
        %799 = vmatprep.subr.bf16.mxu0 0
        %800 = vmatpush1.bf16.msra.mxu0 %v656
        %801 = vmatprep.subr.bf16.mxu0 0
        %802 = vmatpush2.bf16.msra.mxu0 0
        %803 = vmatprep.subr.bf16.mxu0 0
        %804 = vmatpush2.bf16.msra.mxu0 0
        %805 = vmatprep.subr.bf16.mxu0 0
        %806 = vmatpush2.bf16.msra.mxu0 0
        %807 = vmatprep.subr.bf16.mxu0 0
        %808 = vmatpush2.bf16.msra.mxu0 0
        %809 = vmatprep.subr.bf16.mxu0 0
        %810 = vmatpush2.bf16.msra.mxu0 0
        %811 = vmatprep.subr.bf16.mxu0 0
        %812 = vmatpush2.bf16.msra.mxu0 0
        %813 = vmatprep.subr.bf16.mxu0 0
        %814 = vmatpush2.bf16.msra.mxu0 0
        %815 = vmatprep.subr.bf16.mxu0 0
        %816 = vmatpush2.bf16.msra.mxu0 0
        %817 = vmatprep.mubr.bf16.mxu0 0
        %818 = vmatmul.mubr.bf16.gmra.mxu0 %v498
        %v819 = vpop.f32.mrf.mxu0
        %v820 = vadd.f32 %v723, %v819
        %v821 = vpop.f32.mrf.mxu0
        %v822 = vpop.f32.mrf.mxu0
        %v823 = vadd.f32 %v726, %v822
        %v824 = vpop.f32.mrf.mxu0
        %825 = vmatprep.mubr.bf16.mxu0 0
        %826 = vmatmul.mubr.bf16.gmra.mxu0 %v501
        %v827 = vpop.f32.mrf.mxu0
        %v828 = vadd.f32 %v731, %v827
        %v829 = vpop.f32.mrf.mxu0
        %v830 = vpop.f32.mrf.mxu0
        %v831 = vadd.f32 %v734, %v830
        %v832 = vpop.f32.mrf.mxu0
        %833 = vmatprep.mubr.bf16.mxu0 0
        %834 = vmatmul.mubr.bf16.gmra.mxu0 %v504
        %v835 = vpop.f32.mrf.mxu0
        %v836 = vadd.f32 %v739, %v835
        %v837 = vpop.f32.mrf.mxu0
        %v838 = vpop.f32.mrf.mxu0
        %v839 = vadd.f32 %v742, %v838
        %v840 = vpop.f32.mrf.mxu0
        %841 = vmatprep.mubr.bf16.mxu0 0
        %842 = vmatmul.mubr.bf16.gmra.mxu0 %v507
        %v843 = vpop.f32.mrf.mxu0
        %v844 = vadd.f32 %v747, %v843
        %v845 = vpop.f32.mrf.mxu0
        %v846 = vpop.f32.mrf.mxu0
        %v847 = vadd.f32 %v750, %v846
        %v848 = vpop.f32.mrf.mxu0
        %849 = vmatprep.mubr.bf16.mxu0 0
        %850 = vmatmul.mubr.bf16.gmra.mxu0 %v510
        %v851 = vpop.f32.mrf.mxu0
        %v852 = vadd.f32 %v755, %v851
        %v853 = vpop.f32.mrf.mxu0
        %v854 = vpop.f32.mrf.mxu0
        %v855 = vadd.f32 %v758, %v854
        %v856 = vpop.f32.mrf.mxu0
        %857 = vmatprep.mubr.bf16.mxu0 0
        %858 = vmatmul.mubr.bf16.gmra.mxu0 %v513
        %v859 = vpop.f32.mrf.mxu0
        %v860 = vadd.f32 %v763, %v859
        %v861 = vpop.f32.mrf.mxu0
        %v862 = vpop.f32.mrf.mxu0
        %v863 = vadd.f32 %v766, %v862
        %v864 = vpop.f32.mrf.mxu0
        %865 = vmatprep.mubr.bf16.mxu0 0
        %866 = vmatmul.mubr.bf16.gmra.mxu0 %v516
        %v867 = vpop.f32.mrf.mxu0
        %v868 = vadd.f32 %v771, %v867
        %v869 = vpop.f32.mrf.mxu0
        %v870 = vpop.f32.mrf.mxu0
        %v871 = vadd.f32 %v774, %v870
        %v872 = vpop.f32.mrf.mxu0
        %873 = vmatprep.mubr.bf16.mxu0 0
        %874 = vmatmul.mubr.bf16.gmra.mxu0 %v519
        %v875 = vpop.f32.mrf.mxu0
        %v876 = vadd.f32 %v779, %v875
        %v877 = vpop.f32.mrf.mxu0
        %v878 = vpop.f32.mrf.mxu0
        %v879 = vadd.f32 %v782, %v878
        %v880 = vpop.f32.mrf.mxu0
        %881 = vdwg.mxu0
        %v882 = vadd.f32 %v368, %v820
        %v883 = vadd.f32 %v369, %v823
        %v884 = vadd.f32 %v370, %v828
        %v885 = vadd.f32 %v371, %v831
        %v886 = vadd.f32 %v372, %v836
        %v887 = vadd.f32 %v373, %v839
        %v888 = vadd.f32 %v374, %v844
        %v889 = vadd.f32 %v375, %v847
        %v890 = vadd.f32 %v376, %v852
        %v891 = vadd.f32 %v377, %v855
        %v892 = vadd.f32 %v378, %v860
        %v893 = vadd.f32 %v379, %v863
        %v894 = vadd.f32 %v380, %v868
        %v895 = vadd.f32 %v381, %v871
        %v896 = vadd.f32 %v382, %v876
        %v897 = vadd.f32 %v383, %v879
        %898 = vst [vmem:[#allocation2] sm:$0xff] %v882
        %899 = vst [vmem:[#allocation2 + $0x8] sm:$0xff] %v883
        %900 = vst [vmem:[#allocation2 + $0x10] sm:$0xff] %v884
        %901 = vst [vmem:[#allocation2 + $0x18] sm:$0xff] %v885
        %902 = vst [vmem:[#allocation2 + $0x20] sm:$0xff] %v886
        %903 = vst [vmem:[#allocation2 + $0x28] sm:$0xff] %v887
        %904 = vst [vmem:[#allocation2 + $0x30] sm:$0xff] %v888
        %905 = vst [vmem:[#allocation2 + $0x38] sm:$0xff] %v889
        %906 = vst [vmem:[#allocation2 + $0x40] sm:$0xff] %v890
        %907 = vst [vmem:[#allocation2 + $0x48] sm:$0xff] %v891
        %908 = vst [vmem:[#allocation2 + $0x50] sm:$0xff] %v892
        %909 = vst [vmem:[#allocation2 + $0x58] sm:$0xff] %v893
        %910 = vst [vmem:[#allocation2 + $0x60] sm:$0xff] %v894
        %911 = vst [vmem:[#allocation2 + $0x68] sm:$0xff] %v895
        %912 = vst [vmem:[#allocation2 + $0x70] sm:$0xff] %v896
        %913 = vst [vmem:[#allocation2 + $0x78] sm:$0xff] %v897
        // Predicated region
        $region57: #{tpu_custom_call.1} parent=39 // pred_check
          %p914 = pneg %p295
        $region58: #{tpu_custom_call.1} parent=39 // pred_check_branch
          %916 = sbr.rel (%p914) target = $region60
        $region59: #{tpu_custom_call.1} parent=39 // pred_region
          %v917 = vld [vmem:[#allocation2] sm:$0xff]
          %v918 = vld [vmem:[#allocation2 + $0x8] sm:$0xff]
          %v919 = vld [vmem:[#allocation2 + $0x10] sm:$0xff]
          %v920 = vld [vmem:[#allocation2 + $0x18] sm:$0xff]
          %v921 = vld [vmem:[#allocation2 + $0x20] sm:$0xff]
          %v922 = vld [vmem:[#allocation2 + $0x28] sm:$0xff]
          %v923 = vld [vmem:[#allocation2 + $0x30] sm:$0xff]
          %v924 = vld [vmem:[#allocation2 + $0x38] sm:$0xff]
          %v925 = vld [vmem:[#allocation2 + $0x40] sm:$0xff]
          %v926 = vld [vmem:[#allocation2 + $0x48] sm:$0xff]
          %v927 = vld [vmem:[#allocation2 + $0x50] sm:$0xff]
          %v928 = vld [vmem:[#allocation2 + $0x58] sm:$0xff]
          %v929 = vld [vmem:[#allocation2 + $0x60] sm:$0xff]
          %v930 = vld [vmem:[#allocation2 + $0x68] sm:$0xff]
          %v931 = vld [vmem:[#allocation2 + $0x70] sm:$0xff]
          %v932 = vld [vmem:[#allocation2 + $0x78] sm:$0xff]
          %v933 = vpack.c.bf16 %v918, %v917
          %v934 = vpack.c.bf16 %v920, %v919
          %v935 = vpack.c.bf16 %v922, %v921
          %v936 = vpack.c.bf16 %v924, %v923
          %v937 = vpack.c.bf16 %v926, %v925
          %v938 = vpack.c.bf16 %v928, %v927
          %v939 = vpack.c.bf16 %v930, %v929
          %v940 = vpack.c.bf16 %v932, %v931
          %v941 = vld [vmem:[#allocation9] sm:$0xf]
          %v942 = vld [vmem:[#allocation9 + $0x4] sm:$0xf]
          %v943 = vld [vmem:[#allocation9 + $0x8] sm:$0xf]
          %v944 = vld [vmem:[#allocation9 + $0xc] sm:$0xf]
          %v945 = vld [vmem:[#allocation9 + $0x10] sm:$0xf]
          %v946 = vld [vmem:[#allocation9 + $0x14] sm:$0xf]
          %v947 = vld [vmem:[#allocation9 + $0x18] sm:$0xf]
          %v948 = vld [vmem:[#allocation9 + $0x1c] sm:$0xf]
          %v949 = vld [vmem:[#allocation9 + $0x20] sm:$0xf]
          %v950 = vld [vmem:[#allocation9 + $0x24] sm:$0xf]
          %v951 = vld [vmem:[#allocation9 + $0x28] sm:$0xf]
          %v952 = vld [vmem:[#allocation9 + $0x2c] sm:$0xf]
          %v953 = vld [vmem:[#allocation9 + $0x30] sm:$0xf]
          %v954 = vld [vmem:[#allocation9 + $0x34] sm:$0xf]
          %v955 = vld [vmem:[#allocation9 + $0x38] sm:$0xf]
          %v956 = vld [vmem:[#allocation9 + $0x3c] sm:$0xf]
          %v957 = vld [vmem:[%s3] sm:$0x1]
          %v959 = vlaneseq
          %v960 = vshrl.u32 %v959, 7
          %v961 = vsub.s32 0, %v960
          %v962 = vrot.slane %v957, %v961
          %v980 = vunpack.c.l.b16 %v941
          %v981 = vunpack.c.l.b16 %v942
          %v982 = vunpack.c.l.b16 %v943
          %v983 = vunpack.c.l.b16 %v944
          %v984 = vunpack.c.l.b16 %v945
          %v985 = vunpack.c.l.b16 %v946
          %v986 = vunpack.c.l.b16 %v947
          %v987 = vunpack.c.l.b16 %v948
          %v988 = vunpack.c.l.b16 %v949
          %v989 = vunpack.c.l.b16 %v950
          %v990 = vunpack.c.l.b16 %v951
          %v991 = vunpack.c.l.b16 %v952
          %v992 = vunpack.c.l.b16 %v953
          %v993 = vunpack.c.l.b16 %v954
          %v994 = vunpack.c.l.b16 %v955
          %v995 = vunpack.c.l.b16 %v956
          %v996 = vpack.c.b16 %v981, %v980
          %v997 = vpack.c.b16 %v983, %v982
          %v998 = vpack.c.b16 %v985, %v984
          %v999 = vpack.c.b16 %v987, %v986
          %v1000 = vpack.c.b16 %v989, %v988
          %v1001 = vpack.c.b16 %v991, %v990
          %v1002 = vpack.c.b16 %v993, %v992
          %v1003 = vpack.c.b16 %v995, %v994
          %1012 = vmatprep.subr.bf16.mxu0 0
          %1013 = vmatpush1.bf16.msra.mxu0 %v1003
          %1014 = vmatprep.subr.bf16.mxu0 0
          %1015 = vmatpush1.bf16.msra.mxu0 %v1002
          %1016 = vmatprep.subr.bf16.mxu0 0
          %1017 = vmatpush1.bf16.msra.mxu0 %v1001
          %1018 = vmatprep.subr.bf16.mxu0 0
          %1019 = vmatpush1.bf16.msra.mxu0 %v1000
          %1020 = vmatprep.subr.bf16.mxu0 0
          %1021 = vmatpush1.bf16.msra.mxu0 %v999
          %1022 = vmatprep.subr.bf16.mxu0 0
          %1023 = vmatpush1.bf16.msra.mxu0 %v998
          %1024 = vmatprep.subr.bf16.mxu0 0
          %1025 = vmatpush1.bf16.msra.mxu0 %v997
          %1026 = vmatprep.subr.bf16.mxu0 0
          %1027 = vmatpush1.bf16.msra.mxu0 %v996
          %1028 = vmatprep.subr.bf16.mxu0 0
          %1029 = vmatpush2.bf16.msra.mxu0 0
          %1030 = vmatprep.subr.bf16.mxu0 0
          %1031 = vmatpush2.bf16.msra.mxu0 0
          %1032 = vmatprep.subr.bf16.mxu0 0
          %1033 = vmatpush2.bf16.msra.mxu0 0
          %1034 = vmatprep.subr.bf16.mxu0 0
          %1035 = vmatpush2.bf16.msra.mxu0 0
          %1036 = vmatprep.subr.bf16.mxu0 0
          %1037 = vmatpush2.bf16.msra.mxu0 0
          %1038 = vmatprep.subr.bf16.mxu0 0
          %1039 = vmatpush2.bf16.msra.mxu0 0
          %1040 = vmatprep.subr.bf16.mxu0 0
          %1041 = vmatpush2.bf16.msra.mxu0 0
          %1042 = vmatprep.subr.bf16.mxu0 0
          %1043 = vmatpush2.bf16.msra.mxu0 0
          %1044 = vmatprep.mubr.bf16.mxu0 0
          %1045 = vmatmul.mubr.bf16.gmra.mxu0 %v933
          %v1046 = vpop.f32.mrf.mxu0
          %v1047 = vadd.f32 %v962, %v1046
          %v1048 = vpop.f32.mrf.mxu0
          %v1049 = vpop.f32.mrf.mxu0
          %v1050 = vadd.f32 %v962, %v1049
          %v1051 = vpop.f32.mrf.mxu0
          %1052 = vmatprep.mubr.bf16.mxu0 0
          %1053 = vmatmul.mubr.bf16.gmra.mxu0 %v934
          %v1054 = vpop.f32.mrf.mxu0
          %v1055 = vadd.f32 %v962, %v1054
          %v1056 = vpop.f32.mrf.mxu0
          %v1057 = vpop.f32.mrf.mxu0
          %v1058 = vadd.f32 %v962, %v1057
          %v1059 = vpop.f32.mrf.mxu0
          %1060 = vmatprep.mubr.bf16.mxu0 0
          %1061 = vmatmul.mubr.bf16.gmra.mxu0 %v935
          %v1062 = vpop.f32.mrf.mxu0
          %v1063 = vadd.f32 %v962, %v1062
          %v1064 = vpop.f32.mrf.mxu0
          %v1065 = vpop.f32.mrf.mxu0
          %v1066 = vadd.f32 %v962, %v1065
          %v1067 = vpop.f32.mrf.mxu0
          %1068 = vmatprep.mubr.bf16.mxu0 0
          %1069 = vmatmul.mubr.bf16.gmra.mxu0 %v936
          %v1070 = vpop.f32.mrf.mxu0
          %v1071 = vadd.f32 %v962, %v1070
          %v1072 = vpop.f32.mrf.mxu0
          %v1073 = vpop.f32.mrf.mxu0
          %v1074 = vadd.f32 %v962, %v1073
          %v1075 = vpop.f32.mrf.mxu0
          %1076 = vmatprep.mubr.bf16.mxu0 0
          %1077 = vmatmul.mubr.bf16.gmra.mxu0 %v937
          %v1078 = vpop.f32.mrf.mxu0
          %v1079 = vadd.f32 %v962, %v1078
          %v1080 = vpop.f32.mrf.mxu0
          %v1081 = vpop.f32.mrf.mxu0
          %v1082 = vadd.f32 %v962, %v1081
          %v1083 = vpop.f32.mrf.mxu0
          %1084 = vmatprep.mubr.bf16.mxu0 0
          %1085 = vmatmul.mubr.bf16.gmra.mxu0 %v938
          %v1086 = vpop.f32.mrf.mxu0
          %v1087 = vadd.f32 %v962, %v1086
          %v1088 = vpop.f32.mrf.mxu0
          %v1089 = vpop.f32.mrf.mxu0
          %v1090 = vadd.f32 %v962, %v1089
          %v1091 = vpop.f32.mrf.mxu0
          %1092 = vmatprep.mubr.bf16.mxu0 0
          %1093 = vmatmul.mubr.bf16.gmra.mxu0 %v939
          %v1094 = vpop.f32.mrf.mxu0
          %v1095 = vadd.f32 %v962, %v1094
          %v1096 = vpop.f32.mrf.mxu0
          %v1097 = vpop.f32.mrf.mxu0
          %v1098 = vadd.f32 %v962, %v1097
          %v1099 = vpop.f32.mrf.mxu0
          %1100 = vmatprep.mubr.bf16.mxu0 0
          %1101 = vmatmul.mubr.bf16.gmra.mxu0 %v940
          %v1102 = vpop.f32.mrf.mxu0
          %v1103 = vadd.f32 %v962, %v1102
          %v1104 = vpop.f32.mrf.mxu0
          %v1105 = vpop.f32.mrf.mxu0
          %v1106 = vadd.f32 %v962, %v1105
          %v1107 = vpop.f32.mrf.mxu0
          %1108 = vdwg.mxu0
          %v1109 = vld [vmem:[#allocation3] sm:$0x1]
          %vm1110 = vcmp.gt.f32.partialorder %v1047, 0.0
          %vm1111 = vcmp.gt.f32.partialorder %v1050, 0.0
          %vm1112 = vcmp.gt.f32.partialorder %v1055, 0.0
          %vm1113 = vcmp.gt.f32.partialorder %v1058, 0.0
          %vm1114 = vcmp.gt.f32.partialorder %v1063, 0.0
          %vm1115 = vcmp.gt.f32.partialorder %v1066, 0.0
          %vm1116 = vcmp.gt.f32.partialorder %v1071, 0.0
          %vm1117 = vcmp.gt.f32.partialorder %v1074, 0.0
          %vm1118 = vcmp.gt.f32.partialorder %v1079, 0.0
          %vm1119 = vcmp.gt.f32.partialorder %v1082, 0.0
          %vm1120 = vcmp.gt.f32.partialorder %v1087, 0.0
          %vm1121 = vcmp.gt.f32.partialorder %v1090, 0.0
          %vm1122 = vcmp.gt.f32.partialorder %v1095, 0.0
          %vm1123 = vcmp.gt.f32.partialorder %v1098, 0.0
          %vm1124 = vcmp.gt.f32.partialorder %v1103, 0.0
          %vm1125 = vcmp.gt.f32.partialorder %v1106, 0.0
          %v1127 = vlaneseq
          %v1128 = vshrl.u32 %v1127, 7
          %v1129 = vsub.s32 0, %v1128
          %v1130 = vrot.slane %v1109, %v1129
          %1131 = vset.pattern.permute.xlu0 0
          %1132 = vperm.xlu0 %1131, %v1130
          %v1133 = vpop.permute.xlu0 %1132
          %v1135 = vmul.f32 %v1133, %v1047
          %v1136 = vmul.f32 %v1133, %v1050
          %v1137 = vmul.f32 %v1133, %v1055
          %v1138 = vmul.f32 %v1133, %v1058
          %v1139 = vmul.f32 %v1133, %v1063
          %v1140 = vmul.f32 %v1133, %v1066
          %v1141 = vmul.f32 %v1133, %v1071
          %v1142 = vmul.f32 %v1133, %v1074
          %v1143 = vmul.f32 %v1133, %v1079
          %v1144 = vmul.f32 %v1133, %v1082
          %v1145 = vmul.f32 %v1133, %v1087
          %v1146 = vmul.f32 %v1133, %v1090
          %v1147 = vmul.f32 %v1133, %v1095
          %v1148 = vmul.f32 %v1133, %v1098
          %v1149 = vmul.f32 %v1133, %v1103
          %v1150 = vmul.f32 %v1133, %v1106
          %v1151 = vsel %vm1110, %v1047, %v1135
          %v1152 = vsel %vm1111, %v1050, %v1136
          %v1153 = vsel %vm1112, %v1055, %v1137
          %v1154 = vsel %vm1113, %v1058, %v1138
          %v1155 = vsel %vm1114, %v1063, %v1139
          %v1156 = vsel %vm1115, %v1066, %v1140
          %v1157 = vsel %vm1116, %v1071, %v1141
          %v1158 = vsel %vm1117, %v1074, %v1142
          %v1159 = vsel %vm1118, %v1079, %v1143
          %v1160 = vsel %vm1119, %v1082, %v1144
          %v1161 = vsel %vm1120, %v1087, %v1145
          %v1162 = vsel %vm1121, %v1090, %v1146
          %v1163 = vsel %vm1122, %v1095, %v1147
          %v1164 = vsel %vm1123, %v1098, %v1148
          %v1165 = vsel %vm1124, %v1103, %v1149
          %v1166 = vsel %vm1125, %v1106, %v1150
          %1167 = vst [vmem:[%s290] sm:$0xff] %v1151
          %1168 = vst [vmem:[%s290 + $0x8] sm:$0xff] %v1152
          %1169 = vst [vmem:[%s290 + $0x10] sm:$0xff] %v1153
          %1170 = vst [vmem:[%s290 + $0x18] sm:$0xff] %v1154
          %1171 = vst [vmem:[%s290 + $0x20] sm:$0xff] %v1155
          %1172 = vst [vmem:[%s290 + $0x28] sm:$0xff] %v1156
          %1173 = vst [vmem:[%s290 + $0x30] sm:$0xff] %v1157
          %1174 = vst [vmem:[%s290 + $0x38] sm:$0xff] %v1158
          %1175 = vst [vmem:[%s290 + $0x40] sm:$0xff] %v1159
          %1176 = vst [vmem:[%s290 + $0x48] sm:$0xff] %v1160
          %1177 = vst [vmem:[%s290 + $0x50] sm:$0xff] %v1161
          %1178 = vst [vmem:[%s290 + $0x58] sm:$0xff] %v1162
          %1179 = vst [vmem:[%s290 + $0x60] sm:$0xff] %v1163
          %1180 = vst [vmem:[%s290 + $0x68] sm:$0xff] %v1164
          %1181 = vst [vmem:[%s290 + $0x70] sm:$0xff] %v1165
          %1182 = vst [vmem:[%s290 + $0x78] sm:$0xff] %v1166
        $region60: #{tpu_custom_call.1} parent=39 // pred_fallthru
          _
        %s1183 = sand.u32 %s157, 1
        %s1184 = scalar_lea.sflag [#allocation6], %s1183
        %s1185 = sand.u32 %s157, 1
        %s1186 = smul.addr %s1185, 128
        %s1187 = scalar_lea.vmem [#allocation10], %s1186
        // Predicated region
        $region61: #{tpu_custom_call.1} parent=39 // pred_check
          %p1188 = pneg %p167
        $region62: #{tpu_custom_call.1} parent=39 // pred_check_branch
          %1190 = sbr.rel (%p1188) target = $region64
        $region63: #{tpu_custom_call.1} parent=39 // pred_region
          %s1191 = smul.u32 16, %s29
          %s1193 = ssub.s32 2048, 2048
          %1194 = vsyncadd %s1184, %s1193
          %s1195 = smul.addr %s1191, 128
          %s1196 = scalar_lea.hbm %s5, %s1195
          %s1197 = sshll.u32 %s1187, 4
          %s1198 = int_to_ptr.vmem [resolvable:$true] %s1197
          %1203 = dma.vmem_to_hbm [thread:$0]  %s1198, 2048, %s1196, %s1184, 128, 128, 8
        $region64: #{tpu_custom_call.1} parent=39 // pred_fallthru
          _
      $region40: #{tpu_custom_call.1} parent=5 // pred_fallthru
        _
      %p1204 = scmp.le.s32.totalorder 2, %s20
      // Predicated region
      $region65: #{tpu_custom_call.1} parent=5 // pred_check
        %p1205 = pneg %p1204
      $region66: #{tpu_custom_call.1} parent=5 // pred_check_branch
        %1207 = sbr.rel (%p1205) target = $region68
      $region67: #{tpu_custom_call.1} parent=5 // pred_region
        %s1208 = ssub.s32 %s20, 2
        // Predicated region
        $region69: #{tpu_custom_call.1} parent=67 // pred_check
          %p1209 = pneg %p173
        $region70: #{tpu_custom_call.1} parent=67 // pred_check_branch
          %1211 = sbr.rel (%p1209) target = $region72
        $region71: #{tpu_custom_call.1} parent=67 // pred_region
          %s1212 = sand.u32 %s158, 1
          %s1213 = scalar_lea.sflag [#allocation6], %s1212
          %s1214 = sand.u32 %s158, 1
          %s1215 = smul.addr %s1214, 128
          %s1216 = scalar_lea.vmem [#allocation10], %s1215
          %1217 = dma.done %s1213, 2048
        $region72: #{tpu_custom_call.1} parent=67 // pred_fallthru
          _
      $region68: #{tpu_custom_call.1} parent=5 // pred_fallthru
        _
    $region6: #{tpu_custom_call.1} parent=1 // loop_footer
      %s24 = sadd.s32 1, %s20
    $region7: #{tpu_custom_call.1} parent=1 // loop_footer_branch
      %19 = sbr.rel target = $region3
    $region8: #{tpu_custom_call.1} parent=1 // loop_exit
      _
    %1218 = vsyncpa [#allocation5], 1
    %s1219 = scalar_lea.sflag [#allocation5], 1
    %1220 = vsyncpa %s1219, 1
    %1221 = vsyncpa [#allocation8], 1
    %1222 = vsyncpa [#allocation6], 1
    %s1223 = scalar_lea.sflag [#allocation6], 1
    %1224 = vsyncpa %s1223, 1

</llo_original>
